<compile_context>
chip_gen: v7x
topology: tpu7x:2x2x1
jax: 0.10.0
libtpu: 0.0.40
codegen_flags: <defaults>
</compile_context>

<pallas_src>
import functools
from types import SimpleNamespace

import numpy as np

import jax
import jax.numpy as jnp
from jax import lax
from jax.experimental import pallas as pl
from jax.experimental.pallas import tpu as pltpu

USED_C = 6  # default usedC of VAE_Concept_Match


def _cvae_loss_kernel(recs_ref, inp_ref, mus_ref, lv_ref, reprs_ref, conc_ref,
                      w_ref, sel_ref, out_ref, acc_ref, *,
                      n_elems, batch, rows, block_rows, slab, n_slabs,
                      tiles_per_core):
    p = pl.program_id(0)          # core split (parallel)
    i = pl.program_id(1)          # streamed row-block (arbitrary / reduction)

    # ---- per-core accumulator init at the start of this core's sweep ----
    @pl.when(i == 0)
    def _():
        acc_ref[...] = jnp.zeros_like(acc_ref)

    # Logical (unclamped) first row of this block; used for masking ragged /
    # duplicated (clamped) blocks so they contribute exactly zero.
    base = (p * tiles_per_core + i) * block_rows

    def accumulate(start_row):
        r = recs_ref[pl.ds(start_row, slab), :].astype(jnp.float32)
        x = inp_ref[pl.ds(start_row, slab), :].astype(jnp.float32)
        d = r - x
        row_idx = (base + start_row
                   + lax.broadcasted_iota(jnp.int32, (slab, 1), 0))
        d2 = jnp.where(row_idx < rows, d * d, 0.0)
        acc_ref[...] += jnp.sum(d2, axis=0, keepdims=True)   # (1, LANES)

    if n_slabs == 1:
        accumulate(0)
    else:
        def body(s, carry):
            accumulate(pl.multiple_of(s * slab, slab))
            return carry
        lax.fori_loop(0, n_slabs, body, 0, unroll=n_slabs <= 8)

    # ---- finalize once per core, on its last grid step ----
    @pl.when(i == tiles_per_core - 1)
    def _():
        # partial contribution of this core to the mean squared error
        recon = jnp.sum(acc_ref[...], keepdims=True) * (1.0 / float(n_elems))

        # KLD (Burgess=False): -0.5 * sum(1 + logvar - mu^2 - exp(logvar))
        mu = mus_ref[...].astype(jnp.float32)
        lv = lv_ref[...].astype(jnp.float32)
        kld = -0.5 * jnp.sum(1.0 + lv - mu * mu - jnp.exp(lv), keepdims=True)

        # concept match: weighted BCE over the first usedC masked columns
        c = conc_ref[...]                         # (B, NC) targets, -1 = unused
        r = reprs_ref[...].astype(jnp.float32)    # (B, NC) logits
        w = w_ref[...]                            # (1, NC) per-concept weights
        sel = sel_ref[...]                        # (1, NC) selection mask

        # stable log(sigmoid(r)) / log(1 - sigmoid(r)); keep torch's -100 clamp
        logp_exact = jnp.minimum(r, 0.0) - jnp.log(1.0 + jnp.exp(-jnp.abs(r)))
        logp = jnp.maximum(logp_exact, -100.0)
        log1mp = jnp.maximum(logp_exact - r, -100.0)
        bce = -(c * logp + (1.0 - c) * log1mp) * w            # (B, NC)

        total = jnp.sum(bce * sel, keepdims=True)              # (1, 1)
        n_sel = jnp.sum(sel, keepdims=True)                    # (1, 1)
        denom = jnp.maximum(n_sel * float(batch), 1.0)
        closs = jnp.where(n_sel > 0.0, total / denom, 0.0)     # (1, 1)

        lane = lax.broadcasted_iota(jnp.int32, out_ref.shape, 1)
        sub = lax.broadcasted_iota(jnp.int32, out_ref.shape, 0)
        vals = (recon * (lane == 0).astype(jnp.float32)
                + kld * (lane == 1).astype(jnp.float32)
                + closs * (lane == 2).astype(jnp.float32))
        out_ref[...] = jnp.where(sub == 0, vals, 0.0)


def cvae_loss(out_dict, args, usedC=USED_C, max_block_elems=1 << 20):
    """Pallas implementation of CVAE_Loss.forward (returns (loss, losses_dict))."""
    recs = out_dict['RECS']
    inputs = out_dict['INPUTS']
    assert recs.shape == inputs.shape, f"{recs.shape}-{inputs.shape}"
    B = recs.shape[0]
    n_elems = int(np.prod(recs.shape))

    mus = out_dict['MUS']
    if out_dict.get('mu_cluster', None) is not None:
        mus = mus - out_dict['mu_cluster']
    logvars = out_dict['LOGVARS']

    concepts = out_dict['CONCEPTS'].astype(jnp.float32)
    NC = concepts.shape[-1]
    if getattr(args, 'model', None) == 'betaplusglancenet':
        reprs = out_dict['LOGITS'][:, :NC]
    else:
        reprs = out_dict['LATENTS'][:, :NC]

    cew = out_dict.get('CE_WEIGHT', None)
    if cew is None:
        w = jnp.ones((1, NC), jnp.float32)
    else:
        w = jnp.asarray(cew, jnp.float32).reshape(1, NC)

    # first-usedC masked columns, precomputed with a tiny cumsum (no MXU in-kernel)
    maskf = (concepts[0:1, :] != -1.0).astype(jnp.float32)
    cum_excl = jnp.cumsum(maskf, axis=-1) - maskf
    sel = maskf * (cum_excl < float(usedC)).astype(jnp.float32)

    # ---- zero-copy flatten of the recon stream (no jnp.pad of big tensors) ----
    flat_r = recs.reshape(-1)
    flat_i = inputs.reshape(-1)
    lanes = None
    for cand in (2048, 1024, 512, 256, 128):
        if n_elems % cand == 0:
            lanes = cand
            break
    if lanes is None:
        # TODO(synk): rare ragged fallback (n_elems not a multiple of 128) — this
        # pad materializes a copy; the common NCHW case stays on the zero-copy path.
        lanes = 128
        pad = (-n_elems) % lanes
        flat_r = jnp.pad(flat_r, (0, pad))
        flat_i = jnp.pad(flat_i, (0, pad))
    rows = flat_r.shape[0] // lanes
    recs2d = flat_r.reshape(rows, lanes)
    inp2d = flat_i.reshape(rows, lanes)

    # ---- tiling: ~4 MiB (f32) per streamed input block, split over <=2 cores ----
    max_rows = max(8, (max_block_elems // lanes) // 8 * 8)
    if rows <= max_rows:
        block_rows = rows                     # single (possibly unaligned) full block
        num_blocks = 1
    else:
        block_rows = max_rows                 # multiple of 8; last block ragged+masked
        num_blocks = (rows + block_rows - 1) // block_rows
    ncores = 2 if num_blocks >= 2 else 1      # v7x: 2 TCs; no-op elsewhere
    tiles_per_core = (num_blocks + ncores - 1) // ncores

    slab = block_rows
    for cand in (128, 64, 32, 16, 8):
        if block_rows % cand == 0:
            slab = cand
            break
    n_slabs = block_rows // slab

    def stream_map(p, i):
        # clamp so the (possibly over-allocated) last index of core 1 never DMAs
        # out of bounds; its contribution is zeroed by the in-kernel row mask.
        return (jnp.minimum(p * tiles_per_core + i, num_blocks - 1), 0)

    kernel = functools.partial(
        _cvae_loss_kernel,
        n_elems=n_elems, batch=B, rows=rows, block_rows=block_rows,
        slab=slab, n_slabs=n_slabs, tiles_per_core=tiles_per_core)

    itemsize = int(jnp.dtype(recs.dtype).itemsize)
    cost = pl.CostEstimate(
        flops=3 * n_elems + 6 * int(np.prod(mus.shape)) + 10 * B * NC,
        transcendentals=int(np.prod(mus.shape)) + 2 * B * NC,
        bytes_accessed=2 * n_elems * itemsize
        + 4 * (int(np.prod(mus.shape)) + int(np.prod(logvars.shape)) + 3 * B * NC),
    )

    out_vec = pl.pallas_call(
        kernel,
        out_shape=jax.ShapeDtypeStruct((8 * ncores, 128), jnp.float32),
        grid=(ncores, tiles_per_core),
        in_specs=[
            pl.BlockSpec((block_rows, lanes), stream_map),
            pl.BlockSpec((block_rows, lanes), stream_map),
            pl.BlockSpec(mus.shape, lambda p, i: (0, 0)),
            pl.BlockSpec(logvars.shape, lambda p, i: (0, 0)),
            pl.BlockSpec(reprs.shape, lambda p, i: (0, 0)),
            pl.BlockSpec(concepts.shape, lambda p, i: (0, 0)),
            pl.BlockSpec(w.shape, lambda p, i: (0, 0)),
            pl.BlockSpec(sel.shape, lambda p, i: (0, 0)),
        ],
        out_specs=pl.BlockSpec((8, 128), lambda p, i: (p, 0)),
        scratch_shapes=[pltpu.VMEM((1, lanes), jnp.float32)],
        compiler_params=pltpu.CompilerParams(
            dimension_semantics=("parallel", "arbitrary"),
            vmem_limit_bytes=48 * 1024 * 1024,   # <=~24 MiB actually used; v7x-safe
        ),
        cost_estimate=cost,
    )(recs2d, inp2d, mus, logvars, reprs, concepts, w, sel)

    recon = jnp.sum(out_vec[0::8, 0])   # sum per-core partial MSE contributions
    kld = out_vec[0, 1]
    closs = out_vec[0, 2]

    loss1 = recon + args.beta * kld
    # return device scalars (no blocking float() host syncs) so this can be jitted
    losses = {'recon-loss': recon, 'kld': kld}
    if args.w_c > 0:
        losses['c-loss'] = closs
        return loss1 + args.w_c * closs, losses
    return loss1, losses


# ---------------- pure numpy reference of the PyTorch semantics ----------------
def _ref_loss_numpy(out_dict, args, usedC=USED_C):
    r = np.asarray(out_dict['RECS'], np.float32)
    x = np.asarray(out_dict['INPUTS'], np.float32)
    recon = np.mean((r - x) ** 2)
    mu = np.asarray(out_dict['MUS'], np.float32)
    if out_dict.get('mu_cluster', None) is not None:
        mu = mu - np.asarray(out_dict['mu_cluster'], np.float32)
    lv = np.asarray(out_dict['LOGVARS'], np.float32)
    kld = -0.5 * np.sum(1.0 + lv - mu ** 2 - np.exp(lv))
    conc = np.asarray(out_dict['CONCEPTS'], np.float32)
    NC = conc.shape[-1]
    lat = np.asarray(out_dict['LATENTS'], np.float32)[:, :NC]
    mask = conc[0] != -1
    cols = np.where(mask)[0][:usedC]
    cew = out_dict.get('CE_WEIGHT', None)
    wts = np.ones(NC, np.float32) if cew is None else np.asarray(cew, np.float32)
    if cols.size > 0:
        p = 1.0 / (1.0 + np.exp(-lat[:, cols]))
        t = conc[:, cols]
        bce = -(t * np.clip(np.log(p), -100, None)
                + (1 - t) * np.clip(np.log(1 - p), -100, None)) * wts[cols]
        closs = bce.mean()
    else:
        closs = 0.0
    total = recon + args.beta * kld
    if args.w_c > 0:
        total = total + args.w_c * closs
    return float(total)


if __name__ == "__main__":
    args = SimpleNamespace(model='cvae', beta=1.0, w_c=0.5, z_capacity=0.0)

    def build_inputs(key, B, C, H, W, Z, NC):
        k1, k2, k3, k4, k5, k6 = jax.random.split(key, 6)
        inputs = jax.random.uniform(k1, (B, C, H, W), jnp.float32)
        recs = jax.nn.sigmoid(jax.random.normal(k2, (B, C, H, W), jnp.float32))
        mus = 0.5 * jax.random.normal(k3, (B, Z), jnp.float32)
        logvars = 0.1 * jax.random.normal(k4, (B, Z), jnp.float32)
        latents = jax.random.normal(k5, (B, Z), jnp.float32)
        concepts = (jax.random.uniform(k6, (B, NC)) > 0.5).astype(jnp.float32)
        concepts = concepts.at[:, 2].set(-1.0).at[:, 5].set(-1.0)
        return {'RECS': recs, 'INPUTS': inputs, 'MUS': mus, 'LOGVARS': logvars,
                'LATENTS': latents, 'CONCEPTS': concepts,
                'CE_WEIGHT': None, 'mu_cluster': None}

    key = jax.random.PRNGKey(0)
    ka, kb = jax.random.split(key)

    # Test 1: small shapes (single-tile path, default tiling).
    od1 = build_inputs(ka, 2, 4, 16, 16, 32, 8)
    tot1, _ = cvae_loss(od1, args)
    tot1 = jax.block_until_ready(tot1)
    ref1 = _ref_loss_numpy(od1, args)
    assert abs(float(tot1) - ref1) < 1e-3 * max(1.0, abs(ref1)), (float(tot1), ref1)

    # Test 2: forces the multi-tile stream, dual-core split and ragged/clamped
    # last block (small max_block_elems override just to exercise the path).
    od2 = build_inputs(kb, 2, 5, 64, 64, 16, 8)
    tot2, _ = cvae_loss(od2, args, max_block_elems=8 * 2048)
    tot2 = jax.block_until_ready(tot2)
    ref2 = _ref_loss_numpy(od2, args)
    assert abs(float(tot2) - ref2) < 1e-3 * max(1.0, abs(ref2)), (float(tot2), ref2)

    print("KERNEL_OK")
</pallas_src>

<mosaic_0001>
module attributes {stable_mosaic.version = 11 : i64} {
  func.func @_cvae_loss_kernel(%arg0: i32, %arg1: i32, %arg2: memref<1x2048xf32, #tpu.memory_space<vmem>>, %arg3: memref<1x2048xf32, #tpu.memory_space<vmem>>, %arg4: memref<2x32xf32, #tpu.memory_space<vmem>>, %arg5: memref<2x32xf32, #tpu.memory_space<vmem>>, %arg6: memref<2x8xf32, #tpu.memory_space<vmem>>, %arg7: memref<2x8xf32, #tpu.memory_space<vmem>>, %arg8: memref<1x8xf32, #tpu.memory_space<vmem>>, %arg9: memref<1x8xf32, #tpu.memory_space<vmem>>, %arg10: memref<8x128xf32, #tpu.memory_space<vmem>>, %arg11: memref<1x2048xf32, #tpu.memory_space<vmem>>) attributes {dimension_semantics = [#tpu.dimension_semantics<parallel>, #tpu.dimension_semantics<arbitrary>], iteration_bounds = array<i64: 1, 1>, scalar_prefetch = 0 : i64, scratch_operands = 1 : i64, tpu.core_type = #tpu.core_type<tc>, window_params = [{transform_indices = @transform_0, window_bounds = array<i64: 1, 2048>}, {transform_indices = @transform_1, window_bounds = array<i64: 1, 2048>}, {pipeline_mode = #tpu.pipeline_mode<synchronous>, transform_indices = @transform_2, window_bounds = array<i64: 2, 32>}, {pipeline_mode = #tpu.pipeline_mode<synchronous>, transform_indices = @transform_3, window_bounds = array<i64: 2, 32>}, {pipeline_mode = #tpu.pipeline_mode<synchronous>, transform_indices = @transform_4, window_bounds = array<i64: 2, 8>}, {pipeline_mode = #tpu.pipeline_mode<synchronous>, transform_indices = @transform_5, window_bounds = array<i64: 2, 8>}, {pipeline_mode = #tpu.pipeline_mode<synchronous>, transform_indices = @transform_6, window_bounds = array<i64: 1, 8>}, {pipeline_mode = #tpu.pipeline_mode<synchronous>, transform_indices = @transform_7, window_bounds = array<i64: 1, 8>}, {transform_indices = @transform_8, window_bounds = array<i64: 8, 128>}]} {
    %c0_i32 = arith.constant 0 : i32
    %0 = arith.cmpi eq, %arg1, %c0_i32 : i32
    %1 = arith.extui %0 : i1 to i32
    %c0_i32_0 = arith.constant 0 : i32
    %2 = arith.cmpi ne, %1, %c0_i32_0 : i32
    scf.if %2 {
      %cst_14 = arith.constant 0.000000e+00 : f32
      %28 = vector.broadcast %cst_14 : f32 to vector<1x2048xf32>
      %c0_15 = arith.constant 0 : index
      %c0_16 = arith.constant 0 : index
      %29 = vector.load %arg11[%c0_15, %c0_16] : memref<1x2048xf32, #tpu.memory_space<vmem>>, vector<1x2048xf32>
      tpu.vector_store %arg11[%c0_15, %c0_16], %28 {strides = array<i32>} : memref<1x2048xf32, #tpu.memory_space<vmem>>, vector<1x2048xf32>,
    } else {
    }
    %c1_i32 = arith.constant 1 : i32
    %3 = arith.muli %arg0, %c1_i32 : i32
    %4 = arith.addi %3, %arg1 : i32
    %c1_i32_1 = arith.constant 1 : i32
    %5 = arith.muli %4, %c1_i32_1 : i32
    %c0 = arith.constant 0 : index
    %c0_2 = arith.constant 0 : index
    %6 = vector.load %arg2[%c0, %c0_2] : memref<1x2048xf32, #tpu.memory_space<vmem>>, vector<1x2048xf32>
    %c0_3 = arith.constant 0 : index
    %c0_4 = arith.constant 0 : index
    %7 = vector.load %arg3[%c0_3, %c0_4] : memref<1x2048xf32, #tpu.memory_space<vmem>>, vector<1x2048xf32>
    %8 = arith.subf %6, %7 : vector<1x2048xf32>
    %c0_i32_5 = arith.constant 0 : i32
    %9 = arith.addi %5, %c0_i32_5 : i32
    %10 = tpu.iota {dimensions = array<i32: 0>} : vector<1x1xi32>
    %11 = vector.broadcast %9 : i32 to vector<1x1xi32>
    %12 = arith.addi %11, %10 : vector<1x1xi32>
    %c1_i32_6 = arith.constant 1 : i32
    %13 = vector.broadcast %c1_i32_6 : i32 to vector<1x1xi32>
    %14 = arith.cmpi slt, %12, %13 : vector<1x1xi32>
    %15 = arith.mulf %8, %8 : vector<1x2048xf32>
    %cst = arith.constant 0.000000e+00 : f32
    %16 = vector.shape_cast %14 : vector<1x1xi1> to vector<1x1xi1>
    %17 = vector.broadcast %16 : vector<1x1xi1> to vector<1x2048xi1>
    %18 = vector.broadcast %cst : f32 to vector<1x2048xf32>
    %19 = arith.select %17, %15, %18 : vector<1x2048xi1>, vector<1x2048xf32>
    %c0_7 = arith.constant 0 : index
    %c0_8 = arith.constant 0 : index
    %20 = vector.load %arg11[%c0_7, %c0_8] : memref<1x2048xf32, #tpu.memory_space<vmem>>, vector<1x2048xf32>
    %cst_9 = arith.constant dense<0.000000e+00> : vector<2048xf32>
    %21 = vector.multi_reduction <add>, %19, %cst_9 [0] : vector<1x2048xf32> to vector<2048xf32>
    %22 = vector.shape_cast %21 : vector<2048xf32> to vector<1x2048xf32>
    %23 = arith.addf %20, %22 : vector<1x2048xf32>
    %c0_10 = arith.constant 0 : index
    %c0_11 = arith.constant 0 : index
    %24 = vector.load %arg11[%c0_10, %c0_11] : memref<1x2048xf32, #tpu.memory_space<vmem>>, vector<1x2048xf32>
    tpu.vector_store %arg11[%c0_10, %c0_11], %23 {strides = array<i32>} : memref<1x2048xf32, #tpu.memory_space<vmem>>, vector<1x2048xf32>,
    %c0_i32_12 = arith.constant 0 : i32
    %25 = arith.cmpi eq, %arg1, %c0_i32_12 : i32
    %26 = arith.extui %25 : i1 to i32
    %c0_i32_13 = arith.constant 0 : i32
    %27 = arith.cmpi ne, %26, %c0_i32_13 : i32
    scf.if %27 {
      %c0_14 = arith.constant 0 : index
      %c0_15 = arith.constant 0 : index
      %28 = vector.load %arg11[%c0_14, %c0_15] : memref<1x2048xf32, #tpu.memory_space<vmem>>, vector<1x2048xf32>
      %29 = vector.shape_cast %28 : vector<1x2048xf32> to vector<1x1x2048xf32>
      %cst_16 = arith.constant dense<0.000000e+00> : vector<1xf32>
      %30 = vector.multi_reduction <add>, %29, %cst_16 [1, 2] : vector<1x1x2048xf32> to vector<1xf32>
      %31 = vector.shape_cast %30 : vector<1xf32> to vector<1x1x1xf32>
      %32 = vector.extract %31[0, 0, 0] : f32 from vector<1x1x1xf32>
      %33 = vector.broadcast %32 : f32 to vector<1x1xf32>
      %cst_17 = arith.constant 4.8828125E-4 : f32
      %34 = vector.broadcast %cst_17 : f32 to vector<1x1xf32>
      %35 = arith.mulf %33, %34 : vector<1x1xf32>
      %c0_18 = arith.constant 0 : index
      %c0_19 = arith.constant 0 : index
      %36 = vector.load %arg4[%c0_18, %c0_19] : memref<2x32xf32, #tpu.memory_space<vmem>>, vector<2x32xf32>
      %c0_20 = arith.constant 0 : index
      %c0_21 = arith.constant 0 : index
      %37 = vector.load %arg5[%c0_20, %c0_21] : memref<2x32xf32, #tpu.memory_space<vmem>>, vector<2x32xf32>
      %cst_22 = arith.constant 1.000000e+00 : f32
      %38 = vector.broadcast %cst_22 : f32 to vector<2x32xf32>
      %39 = arith.addf %38, %37 : vector<2x32xf32>
      %40 = arith.mulf %36, %36 : vector<2x32xf32>
      %41 = arith.subf %39, %40 : vector<2x32xf32>
      %42 = math.exp %37 : vector<2x32xf32>
      %43 = arith.subf %41, %42 : vector<2x32xf32>
      %44 = vector.shape_cast %43 : vector<2x32xf32> to vector<1x2x32xf32>
      %cst_23 = arith.constant dense<0.000000e+00> : vector<1xf32>
      %45 = vector.multi_reduction <add>, %44, %cst_23 [1, 2] : vector<1x2x32xf32> to vector<1xf32>
      %46 = vector.shape_cast %45 : vector<1xf32> to vector<1x1x1xf32>
      %47 = vector.extract %46[0, 0, 0] : f32 from vector<1x1x1xf32>
      %48 = vector.broadcast %47 : f32 to vector<1x1xf32>
      %cst_24 = arith.constant -5.000000e-01 : f32
      %49 = vector.broadcast %cst_24 : f32 to vector<1x1xf32>
      %50 = arith.mulf %49, %48 : vector<1x1xf32>
      %c0_25 = arith.constant 0 : index
      %c0_26 = arith.constant 0 : index
      %51 = vector.load %arg7[%c0_25, %c0_26] : memref<2x8xf32, #tpu.memory_space<vmem>>, vector<2x8xf32>
      %c0_27 = arith.constant 0 : index
      %c0_28 = arith.constant 0 : index
      %52 = vector.load %arg6[%c0_27, %c0_28] : memref<2x8xf32, #tpu.memory_space<vmem>>, vector<2x8xf32>
      %c0_29 = arith.constant 0 : index
      %c0_30 = arith.constant 0 : index
      %53 = vector.load %arg8[%c0_29, %c0_30] : memref<1x8xf32, #tpu.memory_space<vmem>>, vector<1x8xf32>
      %c0_31 = arith.constant 0 : index
      %c0_32 = arith.constant 0 : index
      %54 = vector.load %arg9[%c0_31, %c0_32] : memref<1x8xf32, #tpu.memory_space<vmem>>, vector<1x8xf32>
      %cst_33 = arith.constant 0.000000e+00 : f32
      %55 = vector.broadcast %cst_33 : f32 to vector<2x8xf32>
      %56 = arith.minimumf %52, %55 : vector<2x8xf32>
      %57 = math.absf %52 : vector<2x8xf32>
      %cst_34 = arith.constant 0.000000e+00 : f32
      %58 = vector.broadcast %cst_34 : f32 to vector<2x8xf32>
      %59 = arith.subf %58, %57 : vector<2x8xf32>
      %60 = math.exp %59 : vector<2x8xf32>
      %cst_35 = arith.constant 1.000000e+00 : f32
      %61 = vector.broadcast %cst_35 : f32 to vector<2x8xf32>
      %62 = arith.addf %61, %60 : vector<2x8xf32>
      %63 = math.log %62 : vector<2x8xf32>
      %64 = arith.subf %56, %63 : vector<2x8xf32>
      %cst_36 = arith.constant -1.000000e+02 : f32
      %65 = vector.broadcast %cst_36 : f32 to vector<2x8xf32>
      %66 = arith.maximumf %64, %65 : vector<2x8xf32>
      %67 = arith.subf %64, %52 : vector<2x8xf32>
      %cst_37 = arith.constant -1.000000e+02 : f32
      %68 = vector.broadcast %cst_37 : f32 to vector<2x8xf32>
      %69 = arith.maximumf %67, %68 : vector<2x8xf32>
      %70 = arith.mulf %51, %66 : vector<2x8xf32>
      %cst_38 = arith.constant 1.000000e+00 : f32
      %71 = vector.broadcast %cst_38 : f32 to vector<2x8xf32>
      %72 = arith.subf %71, %51 : vector<2x8xf32>
      %73 = arith.mulf %72, %69 : vector<2x8xf32>
      %74 = arith.addf %70, %73 : vector<2x8xf32>
      %cst_39 = arith.constant 0.000000e+00 : f32
      %75 = vector.broadcast %cst_39 : f32 to vector<2x8xf32>
      %76 = arith.subf %75, %74 : vector<2x8xf32>
      %77 = vector.broadcast %53 : vector<1x8xf32> to vector<2x8xf32>
      %78 = arith.mulf %76, %77 : vector<2x8xf32>
      %79 = vector.broadcast %54 : vector<1x8xf32> to vector<2x8xf32>
      %80 = arith.mulf %78, %79 : vector<2x8xf32>
      %81 = vector.shape_cast %80 : vector<2x8xf32> to vector<1x2x8xf32>
      %cst_40 = arith.constant dense<0.000000e+00> : vector<1xf32>
      %82 = vector.multi_reduction <add>, %81, %cst_40 [1, 2] : vector<1x2x8xf32> to vector<1xf32>
      %83 = vector.shape_cast %82 : vector<1xf32> to vector<1x1x1xf32>
      %84 = vector.extract %83[0, 0, 0] : f32 from vector<1x1x1xf32>
      %85 = vector.broadcast %84 : f32 to vector<1x1xf32>
      %86 = vector.shape_cast %54 : vector<1x8xf32> to vector<1x1x8xf32>
      %cst_41 = arith.constant dense<0.000000e+00> : vector<1xf32>
      %87 = vector.multi_reduction <add>, %86, %cst_41 [1, 2] : vector<1x1x8xf32> to vector<1xf32>
      %88 = vector.shape_cast %87 : vector<1xf32> to vector<1x1x1xf32>
      %89 = vector.extract %88[0, 0, 0] : f32 from vector<1x1x1xf32>
      %90 = vector.broadcast %89 : f32 to vector<1x1xf32>
      %cst_42 = arith.constant 2.000000e+00 : f32
      %91 = vector.broadcast %cst_42 : f32 to vector<1x1xf32>
      %92 = arith.mulf %90, %91 : vector<1x1xf32>
      %cst_43 = arith.constant 1.000000e+00 : f32
      %93 = vector.broadcast %cst_43 : f32 to vector<1x1xf32>
      %94 = arith.maximumf %92, %93 : vector<1x1xf32>
      %cst_44 = arith.constant 0.000000e+00 : f32
      %95 = vector.broadcast %cst_44 : f32 to vector<1x1xf32>
      %96 = arith.cmpf ogt, %90, %95 : vector<1x1xf32>
      %97 = arith.divf %85, %94 : vector<1x1xf32>
      %cst_45 = arith.constant 0.000000e+00 : f32
      %98 = vector.broadcast %cst_45 : f32 to vector<1x1xf32>
      %99 = arith.select %96, %97, %98 : vector<1x1xi1>, vector<1x1xf32>
      %100 = tpu.iota {dimensions = array<i32: 1>} : vector<8x128xi32>
      %101 = tpu.iota {dimensions = array<i32: 0>} : vector<8x128xi32>
      %c0_i32_46 = arith.constant 0 : i32
      %102 = vector.broadcast %c0_i32_46 : i32 to vector<8x128xi32>
      %103 = arith.cmpi eq, %100, %102 : vector<8x128xi32>
      %104 = arith.extui %103 : vector<8x128xi1> to vector<8x128xi32>
      %105 = arith.sitofp %104 : vector<8x128xi32> to vector<8x128xf32>
      %106 = vector.broadcast %35 : vector<1x1xf32> to vector<8x128xf32>
      %107 = arith.mulf %106, %105 : vector<8x128xf32>
      %c1_i32_47 = arith.constant 1 : i32
      %108 = vector.broadcast %c1_i32_47 : i32 to vector<8x128xi32>
      %109 = arith.cmpi eq, %100, %108 : vector<8x128xi32>
      %110 = arith.extui %109 : vector<8x128xi1> to vector<8x128xi32>
      %111 = arith.sitofp %110 : vector<8x128xi32> to vector<8x128xf32>
      %112 = vector.broadcast %50 : vector<1x1xf32> to vector<8x128xf32>
      %113 = arith.mulf %112, %111 : vector<8x128xf32>
      %114 = arith.addf %107, %113 : vector<8x128xf32>
      %c2_i32 = arith.constant 2 : i32
      %115 = vector.broadcast %c2_i32 : i32 to vector<8x128xi32>
      %116 = arith.cmpi eq, %100, %115 : vector<8x128xi32>
      %117 = arith.extui %116 : vector<8x128xi1> to vector<8x128xi32>
      %118 = arith.sitofp %117 : vector<8x128xi32> to vector<8x128xf32>
      %119 = vector.broadcast %99 : vector<1x1xf32> to vector<8x128xf32>
      %120 = arith.mulf %119, %118 : vector<8x128xf32>
      %121 = arith.addf %114, %120 : vector<8x128xf32>
      %c0_i32_48 = arith.constant 0 : i32
      %122 = vector.broadcast %c0_i32_48 : i32 to vector<8x128xi32>
      %123 = arith.cmpi eq, %101, %122 : vector<8x128xi32>
      %cst_49 = arith.constant 0.000000e+00 : f32
      %124 = vector.broadcast %cst_49 : f32 to vector<8x128xf32>
      %125 = arith.select %123, %121, %124 : vector<8x128xi1>, vector<8x128xf32>
      %c0_50 = arith.constant 0 : index
      %c0_51 = arith.constant 0 : index
      %126 = vector.load %arg10[%c0_50, %c0_51] : memref<8x128xf32, #tpu.memory_space<vmem>>, vector<8x128xf32>
      tpu.vector_store %arg10[%c0_50, %c0_51], %125 {strides = array<i32>} : memref<8x128xf32, #tpu.memory_space<vmem>>, vector<8x128xf32>,
    } else {
    }
    return
  }
  func.func @transform_0(%arg0: i32, %arg1: i32) -> (i32, i32) {
    %c1_i32 = arith.constant 1 : i32
    %0 = arith.muli %arg0, %c1_i32 : i32
    %1 = arith.addi %0, %arg1 : i32
    %c0_i32 = arith.constant 0 : i32
    %2 = arith.minsi %1, %c0_i32 : i32
    %c0_i32_0 = arith.constant 0 : i32
    %c0_i32_1 = arith.constant 0 : i32
    return %2, %c0_i32_0 : i32, i32
  }
  func.func @transform_1(%arg0: i32, %arg1: i32) -> (i32, i32) {
    %c1_i32 = arith.constant 1 : i32
    %0 = arith.muli %arg0, %c1_i32 : i32
    %1 = arith.addi %0, %arg1 : i32
    %c0_i32 = arith.constant 0 : i32
    %2 = arith.minsi %1, %c0_i32 : i32
    %c0_i32_0 = arith.constant 0 : i32
    %c0_i32_1 = arith.constant 0 : i32
    return %2, %c0_i32_0 : i32, i32
  }
  func.func @transform_2(%arg0: i32, %arg1: i32) -> (i32, i32) {
    %c0_i32 = arith.constant 0 : i32
    %c0_i32_0 = arith.constant 0 : i32
    %c0_i32_1 = arith.constant 0 : i32
    return %c0_i32, %c0_i32_0 : i32, i32
  }
  func.func @transform_3(%arg0: i32, %arg1: i32) -> (i32, i32) {
    %c0_i32 = arith.constant 0 : i32
    %c0_i32_0 = arith.constant 0 : i32
    %c0_i32_1 = arith.constant 0 : i32
    return %c0_i32, %c0_i32_0 : i32, i32
  }
  func.func @transform_4(%arg0: i32, %arg1: i32) -> (i32, i32) {
    %c0_i32 = arith.constant 0 : i32
    %c0_i32_0 = arith.constant 0 : i32
    %c0_i32_1 = arith.constant 0 : i32
    return %c0_i32, %c0_i32_0 : i32, i32
  }
  func.func @transform_5(%arg0: i32, %arg1: i32) -> (i32, i32) {
    %c0_i32 = arith.constant 0 : i32
    %c0_i32_0 = arith.constant 0 : i32
    %c0_i32_1 = arith.constant 0 : i32
    return %c0_i32, %c0_i32_0 : i32, i32
  }
  func.func @transform_6(%arg0: i32, %arg1: i32) -> (i32, i32) {
    %c0_i32 = arith.constant 0 : i32
    %c0_i32_0 = arith.constant 0 : i32
    %c0_i32_1 = arith.constant 0 : i32
    return %c0_i32, %c0_i32_0 : i32, i32
  }
  func.func @transform_7(%arg0: i32, %arg1: i32) -> (i32, i32) {
    %c0_i32 = arith.constant 0 : i32
    %c0_i32_0 = arith.constant 0 : i32
    %c0_i32_1 = arith.constant 0 : i32
    return %c0_i32, %c0_i32_0 : i32, i32
  }
  func.func @transform_8(%arg0: i32, %arg1: i32) -> (i32, i32) {
    %c0_i32 = arith.constant 0 : i32
    %c0_i32_0 = arith.constant 0 : i32
    return %arg0, %c0_i32 : i32, i32
  }
}

</mosaic_0001>

<llo_original>
// kernel: tpu_custom_call.1
$region0: #{tpu_custom_call.1}
  #allocation0 [shape = 'u32[]', space=smem, size = 0x4, offset = 0x4, fixed_abs, tag = 'smem constant byte address 0x4 - core index']
  #allocation1 [shape = 'u32[144,128]{1,0:T(1,128)}', space=vmem, size = 0x12000, scoped, tag = 'internal scratch']
  #allocation2 [shape = 'f32[1,2048]{1,0:T(1,128)}', space=vmem, size = 0x2000, scoped, tag = 'scratch operand']
  %s0 = inlined_call_operand.hbm [shape: f32[1,2048], index: 0, kind: input, shape index: {}]
  %s1 = inlined_call_operand.hbm [shape: f32[1,2048], index: 1, kind: input, shape index: {}]
  %s2 = inlined_call_operand.vmem [shape: f32[2,32], index: 2, kind: input, shape index: {}]
  %s3 = inlined_call_operand.vmem [shape: f32[2,32], index: 3, kind: input, shape index: {}]
  %s4 = inlined_call_operand.vmem [shape: f32[2,8], index: 4, kind: input, shape index: {}]
  %s5 = inlined_call_operand.vmem [shape: f32[2,8], index: 5, kind: input, shape index: {}]
  %s6 = inlined_call_operand.vmem [shape: f32[1,8], index: 6, kind: input, shape index: {}]
  %s7 = inlined_call_operand.vmem [shape: f32[1,8], index: 7, kind: input, shape index: {}]
  %s8 = inlined_call_operand.hbm [shape: f32[8,128], index: 8, kind: output, shape index: {}]
  %s9 = sld [smem:[#allocation0]]
  $region58: #{tpu_custom_call.1} parent=0
    _
  %s11 = ssub.s32 1, %s9
  %s12 = scalar_select 0, %s11, %s9
  $region1: #{tpu_custom_call.1} parent=0
    #allocation3 [shape = 'u8[8192]{0}', space=vmem, size = 0x2000, scoped, tag = 'input window, operand 0, single buffered']
    #allocation4 [shape = 's32[1]{0}', space=sflag, size = 0x4, scoped, tag = 'scoped memory for tpu_custom_call.1']
    #allocation5 [shape = 's32[1]{0}', space=sflag, size = 0x4, scoped, tag = 'scoped memory for tpu_custom_call.1']
    #allocation6 [shape = 'u8[8192]{0}', space=vmem, size = 0x2000, scoped, tag = 'input window, operand 1, single buffered']
    #allocation7 [shape = 's32[1]{0}', space=sflag, size = 0x4, scoped, tag = 'scoped memory for tpu_custom_call.1']
    #allocation8 [shape = 'u8[4096]{0}', space=vmem, size = 0x1000, scoped, tag = 'output window, operand 0, single buffered']
    %13 = vsyncpa [#allocation4], 0
    %14 = vsyncpa [#allocation7], 0
    %15 = vsyncpa [#allocation5], 0
    // Predicated region
    $region2: #{tpu_custom_call.1} parent=1 // pred_check
      _
    $region3: #{tpu_custom_call.1} parent=1 // pred_check_branch
      %17 = sbr.rel (0) target = $region5
    $region4: #{tpu_custom_call.1} parent=1 // pred_region
      %s18 = sadd.s32 0, 0
      %p19 = scmp.lt.s32.totalorder %s18, 0
      %s20 = scalar_select %p19, %s18, 0
      %s22 = ssub.s32 256, 256
      %23 = vsyncadd [#allocation4], %s22
      %s24 = smul.addr %s20, 16
      %s25 = smul.addr %s24, 16
      %s26 = scalar_lea.hbm %s0, %s25
      %s28 = sshll.u32 [#allocation3], 4
      %s29 = int_to_ptr.vmem [resolvable:$true] %s28
      %31 = dma.hbm_to_vmem [thread:$0]  %s26, 256, %s29, [#allocation4]
    $region5: #{tpu_custom_call.1} parent=1 // pred_fallthru
      _
    // Predicated region
    $region6: #{tpu_custom_call.1} parent=1 // pred_check
      _
    $region7: #{tpu_custom_call.1} parent=1 // pred_check_branch
      %33 = sbr.rel (0) target = $region9
    $region8: #{tpu_custom_call.1} parent=1 // pred_region
      %s34 = sadd.s32 0, 0
      %p35 = scmp.lt.s32.totalorder %s34, 0
      %s36 = scalar_select %p35, %s34, 0
      %s38 = ssub.s32 256, 256
      %39 = vsyncadd [#allocation7], %s38
      %s40 = smul.addr %s36, 16
      %s41 = smul.addr %s40, 16
      %s42 = scalar_lea.hbm %s1, %s41
      %s44 = sshll.u32 [#allocation6], 4
      %s45 = int_to_ptr.vmem [resolvable:$true] %s44
      %47 = dma.hbm_to_vmem [thread:$0]  %s42, 256, %s45, [#allocation7]
    $region9: #{tpu_custom_call.1} parent=1 // pred_fallthru
      _
    // Predicated region
    $region10: #{tpu_custom_call.1} parent=1 // pred_check
      _
    $region11: #{tpu_custom_call.1} parent=1 // pred_check_branch
      %49 = sbr.rel (0) target = $region13
    $region12: #{tpu_custom_call.1} parent=1 // pred_region
      _
    $region13: #{tpu_custom_call.1} parent=1 // pred_fallthru
      _
    // Predicated region
    $region14: #{tpu_custom_call.1} parent=1 // pred_check
      _
    $region15: #{tpu_custom_call.1} parent=1 // pred_check_branch
      %51 = sbr.rel (0) target = $region17
    $region16: #{tpu_custom_call.1} parent=1 // pred_region
      _
    $region17: #{tpu_custom_call.1} parent=1 // pred_fallthru
      _
    // Predicated region
    $region18: #{tpu_custom_call.1} parent=1 // pred_check
      _
    $region19: #{tpu_custom_call.1} parent=1 // pred_check_branch
      %53 = sbr.rel (0) target = $region21
    $region20: #{tpu_custom_call.1} parent=1 // pred_region
      _
    $region21: #{tpu_custom_call.1} parent=1 // pred_fallthru
      _
    // Predicated region
    $region22: #{tpu_custom_call.1} parent=1 // pred_check
      _
    $region23: #{tpu_custom_call.1} parent=1 // pred_check_branch
      %55 = sbr.rel (0) target = $region25
    $region24: #{tpu_custom_call.1} parent=1 // pred_region
      _
    $region25: #{tpu_custom_call.1} parent=1 // pred_fallthru
      _
    // Predicated region
    $region26: #{tpu_custom_call.1} parent=1 // pred_check
      _
    $region27: #{tpu_custom_call.1} parent=1 // pred_check_branch
      %57 = sbr.rel (0) target = $region29
    $region28: #{tpu_custom_call.1} parent=1 // pred_region
      _
    $region29: #{tpu_custom_call.1} parent=1 // pred_fallthru
      _
    // Predicated region
    $region30: #{tpu_custom_call.1} parent=1 // pred_check
      _
    $region31: #{tpu_custom_call.1} parent=1 // pred_check_branch
      %59 = sbr.rel (0) target = $region33
    $region32: #{tpu_custom_call.1} parent=1 // pred_region
      _
    $region33: #{tpu_custom_call.1} parent=1 // pred_fallthru
      _
    // Predicated region
    $region34: #{tpu_custom_call.1} parent=1 // pred_check
      _
    $region35: #{tpu_custom_call.1} parent=1 // pred_check_branch
      %61 = sbr.rel (0) target = $region37
    $region36: #{tpu_custom_call.1} parent=1 // pred_region
      %62 = dma.done [#allocation4], 256
    $region37: #{tpu_custom_call.1} parent=1 // pred_fallthru
      _
    // Predicated region
    $region38: #{tpu_custom_call.1} parent=1 // pred_check
      _
    $region39: #{tpu_custom_call.1} parent=1 // pred_check_branch
      %64 = sbr.rel (0) target = $region41
    $region40: #{tpu_custom_call.1} parent=1 // pred_region
      %65 = dma.done [#allocation7], 256
    $region41: #{tpu_custom_call.1} parent=1 // pred_fallthru
      _
    %s66 = sadd.s32 0, 0
    %p67 = scmp.lt.s32.totalorder %s66, 0
    %s68 = scalar_select %p67, %s66, 0
    %s69 = sadd.s32 0, 0
    %p70 = scmp.lt.s32.totalorder %s69, 0
    %s71 = scalar_select %p70, %s69, 0
    %p72 = scmp.eq.s32.totalorder 0, 0
    // Predicated region
    $region42: #{tpu_custom_call.1} parent=1 // pred_check
      %p73 = pneg %p72
    $region43: #{tpu_custom_call.1} parent=1 // pred_check_branch
      %75 = sbr.rel (%p73) target = $region45
    $region44: #{tpu_custom_call.1} parent=1 // pred_region
      %76 = vst [vmem:[#allocation2] sm:$0xff] 0.0
      %77 = vst [vmem:[#allocation2 + $0x8] sm:$0xff] 0.0
    $region45: #{tpu_custom_call.1} parent=1 // pred_fallthru
      _
    %s78 = sadd.s32 0, 0
    %v79 = vld [vmem:[#allocation3] sm:$0xff]
    %v80 = vld [vmem:[#allocation3 + $0x8] sm:$0xff]
    %v81 = vld [vmem:[#allocation6] sm:$0xff]
    %v82 = vld [vmem:[#allocation6 + $0x8] sm:$0xff]
    %v83 = vsub.f32 %v79, %v81
    %v84 = vsub.f32 %v80, %v82
    %v85 = vlaneseq
    %v86 = vshrl.u32 %v85, 7
    %v87 = vstv %s78
    %v88 = vadd.s32 %v87, %v86
    %vm89 = vcmp.lt.s32.totalorder %v88, 1
    %v90 = vmul.f32 %v83, %v83
    %v91 = vmul.f32 %v84, %v84
    %v92 = vsel %vm89, 1, 0
    %vm93 = vcmp.eq.s32.totalorder %v92, 1
    %v96 = vlaneseq
    %v97 = vshrl.u32 %v96, 7
    %v98 = vsub.s32 0, %v97
    %v99 = vrot.slane %v90, %v98
    %v100 = vlaneseq
    %v101 = vshrl.u32 %v100, 7
    %v102 = vsub.s32 1, %v101
    %v103 = vrot.slane %v90, %v102
    %v104 = vlaneseq
    %v105 = vshrl.u32 %v104, 7
    %v106 = vsub.s32 2, %v105
    %v107 = vrot.slane %v90, %v106
    %v108 = vlaneseq
    %v109 = vshrl.u32 %v108, 7
    %v110 = vsub.s32 3, %v109
    %v111 = vrot.slane %v90, %v110
    %v112 = vlaneseq
    %v113 = vshrl.u32 %v112, 7
    %v114 = vsub.s32 4, %v113
    %v115 = vrot.slane %v90, %v114
    %v116 = vlaneseq
    %v117 = vshrl.u32 %v116, 7
    %v118 = vsub.s32 5, %v117
    %v119 = vrot.slane %v90, %v118
    %v120 = vlaneseq
    %v121 = vshrl.u32 %v120, 7
    %v122 = vsub.s32 6, %v121
    %v123 = vrot.slane %v90, %v122
    %v124 = vlaneseq
    %v125 = vshrl.u32 %v124, 7
    %v126 = vsub.s32 7, %v125
    %v127 = vrot.slane %v90, %v126
    %v128 = vlaneseq
    %v129 = vshrl.u32 %v128, 7
    %v130 = vsub.s32 0, %v129
    %v131 = vrot.slane %v91, %v130
    %v132 = vlaneseq
    %v133 = vshrl.u32 %v132, 7
    %v134 = vsub.s32 1, %v133
    %v135 = vrot.slane %v91, %v134
    %v136 = vlaneseq
    %v137 = vshrl.u32 %v136, 7
    %v138 = vsub.s32 2, %v137
    %v139 = vrot.slane %v91, %v138
    %v140 = vlaneseq
    %v141 = vshrl.u32 %v140, 7
    %v142 = vsub.s32 3, %v141
    %v143 = vrot.slane %v91, %v142
    %v144 = vlaneseq
    %v145 = vshrl.u32 %v144, 7
    %v146 = vsub.s32 4, %v145
    %v147 = vrot.slane %v91, %v146
    %v148 = vlaneseq
    %v149 = vshrl.u32 %v148, 7
    %v150 = vsub.s32 5, %v149
    %v151 = vrot.slane %v91, %v150
    %v152 = vlaneseq
    %v153 = vshrl.u32 %v152, 7
    %v154 = vsub.s32 6, %v153
    %v155 = vrot.slane %v91, %v154
    %v156 = vlaneseq
    %v157 = vshrl.u32 %v156, 7
    %v158 = vsub.s32 7, %v157
    %v159 = vrot.slane %v91, %v158
    %v176 = vsel %vm93, %v99, 0.0
    %v177 = vsel %vm93, %v103, 0.0
    %v178 = vsel %vm93, %v107, 0.0
    %v179 = vsel %vm93, %v111, 0.0
    %v180 = vsel %vm93, %v115, 0.0
    %v181 = vsel %vm93, %v119, 0.0
    %v182 = vsel %vm93, %v123, 0.0
    %v183 = vsel %vm93, %v127, 0.0
    %v184 = vsel %vm93, %v131, 0.0
    %v185 = vsel %vm93, %v135, 0.0
    %v186 = vsel %vm93, %v139, 0.0
    %v187 = vsel %vm93, %v143, 0.0
    %v188 = vsel %vm93, %v147, 0.0
    %v189 = vsel %vm93, %v151, 0.0
    %v190 = vsel %vm93, %v155, 0.0
    %v191 = vsel %vm93, %v159, 0.0
    %v192 = vld [vmem:[#allocation2] sm:$0xff]
    %v193 = vld [vmem:[#allocation2 + $0x8] sm:$0xff]
    %v194 = vadd.f32 %v176, 0.0
    %v195 = vadd.f32 %v177, 0.0
    %v196 = vadd.f32 %v178, 0.0
    %v197 = vadd.f32 %v179, 0.0
    %v198 = vadd.f32 %v180, 0.0
    %v199 = vadd.f32 %v181, 0.0
    %v200 = vadd.f32 %v182, 0.0
    %v201 = vadd.f32 %v183, 0.0
    %v202 = vadd.f32 %v184, 0.0
    %v203 = vadd.f32 %v185, 0.0
    %v204 = vadd.f32 %v186, 0.0
    %v205 = vadd.f32 %v187, 0.0
    %v206 = vadd.f32 %v188, 0.0
    %v207 = vadd.f32 %v189, 0.0
    %v208 = vadd.f32 %v190, 0.0
    %v209 = vadd.f32 %v191, 0.0
    %v226 = vcombine.low %v194, %v195
    %v227 = vcombine.low %v196, %v197
    %v228 = vcombine.low %v198, %v199
    %v229 = vcombine.low %v200, %v201
    %v231 = vunpack.c.l.s4 1966171168
    %v232 = vunpack.c.0.s8 %v231
    %v233 = vlaneseq
    %v234 = vshrl.u32 %v233, 7
    %v235 = vsub.s32 %v232, %v234
    %v236 = vrot.slane %v226, %v235
    %v238 = vunpack.c.l.s4 1966171168
    %v239 = vunpack.c.0.s8 %v238
    %v240 = vlaneseq
    %v241 = vshrl.u32 %v240, 7
    %v242 = vsub.s32 %v239, %v241
    %v243 = vrot.slane %v227, %v242
    %v245 = vunpack.c.l.s4 1966171168
    %v246 = vunpack.c.0.s8 %v245
    %v247 = vlaneseq
    %v248 = vshrl.u32 %v247, 7
    %v249 = vsub.s32 %v246, %v248
    %v250 = vrot.slane %v228, %v249
    %v252 = vunpack.c.l.s4 1966171168
    %v253 = vunpack.c.0.s8 %v252
    %v254 = vlaneseq
    %v255 = vshrl.u32 %v254, 7
    %v256 = vsub.s32 %v253, %v255
    %v257 = vrot.slane %v229, %v256
    %v258 = vcombine.low %v236, %v243
    %v259 = vcombine.low %v250, %v257
    %v261 = vunpack.c.l.s4 1966171168
    %v262 = vunpack.c.0.s8 %v261
    %v263 = vlaneseq
    %v264 = vshrl.u32 %v263, 7
    %v265 = vsub.s32 %v262, %v264
    %v266 = vrot.slane %v258, %v265
    %v268 = vunpack.c.l.s4 1966171168
    %v269 = vunpack.c.0.s8 %v268
    %v270 = vlaneseq
    %v271 = vshrl.u32 %v270, 7
    %v272 = vsub.s32 %v269, %v271
    %v273 = vrot.slane %v259, %v272
    %v274 = vcombine.low %v266, %v273
    %v275 = vcombine.low %v202, %v203
    %v276 = vcombine.low %v204, %v205
    %v277 = vcombine.low %v206, %v207
    %v278 = vcombine.low %v208, %v209
    %v280 = vunpack.c.l.s4 1966171168
    %v281 = vunpack.c.0.s8 %v280
    %v282 = vlaneseq
    %v283 = vshrl.u32 %v282, 7
    %v284 = vsub.s32 %v281, %v283
    %v285 = vrot.slane %v275, %v284
    %v287 = vunpack.c.l.s4 1966171168
    %v288 = vunpack.c.0.s8 %v287
    %v289 = vlaneseq
    %v290 = vshrl.u32 %v289, 7
    %v291 = vsub.s32 %v288, %v290
    %v292 = vrot.slane %v276, %v291
    %v294 = vunpack.c.l.s4 1966171168
    %v295 = vunpack.c.0.s8 %v294
    %v296 = vlaneseq
    %v297 = vshrl.u32 %v296, 7
    %v298 = vsub.s32 %v295, %v297
    %v299 = vrot.slane %v277, %v298
    %v301 = vunpack.c.l.s4 1966171168
    %v302 = vunpack.c.0.s8 %v301
    %v303 = vlaneseq
    %v304 = vshrl.u32 %v303, 7
    %v305 = vsub.s32 %v302, %v304
    %v306 = vrot.slane %v278, %v305
    %v307 = vcombine.low %v285, %v292
    %v308 = vcombine.low %v299, %v306
    %v310 = vunpack.c.l.s4 1966171168
    %v311 = vunpack.c.0.s8 %v310
    %v312 = vlaneseq
    %v313 = vshrl.u32 %v312, 7
    %v314 = vsub.s32 %v311, %v313
    %v315 = vrot.slane %v307, %v314
    %v317 = vunpack.c.l.s4 1966171168
    %v318 = vunpack.c.0.s8 %v317
    %v319 = vlaneseq
    %v320 = vshrl.u32 %v319, 7
    %v321 = vsub.s32 %v318, %v320
    %v322 = vrot.slane %v308, %v321
    %v323 = vcombine.low %v315, %v322
    %v326 = vadd.f32 %v192, %v274
    %v327 = vadd.f32 %v193, %v323
    %328 = vst [vmem:[#allocation2] sm:$0xff] %v326
    %329 = vst [vmem:[#allocation2 + $0x8] sm:$0xff] %v327
    // Predicated region
    $region46: #{tpu_custom_call.1} parent=1 // pred_check
      %p330 = pneg %p72
    $region47: #{tpu_custom_call.1} parent=1 // pred_check_branch
      %332 = sbr.rel (%p330) target = $region49
    $region48: #{tpu_custom_call.1} parent=1 // pred_region
      %v333 = vld [vmem:[#allocation2] sm:$0xff]
      %v334 = vld [vmem:[#allocation2 + $0x8] sm:$0xff]
      %v337 = vlaneseq
      %v338 = vshrl.u32 %v337, 7
      %v339 = vsub.s32 0, %v338
      %v340 = vrot.slane %v333, %v339
      %v341 = vlaneseq
      %v342 = vshrl.u32 %v341, 7
      %v343 = vsub.s32 1, %v342
      %v344 = vrot.slane %v333, %v343
      %v345 = vlaneseq
      %v346 = vshrl.u32 %v345, 7
      %v347 = vsub.s32 2, %v346
      %v348 = vrot.slane %v333, %v347
      %v349 = vlaneseq
      %v350 = vshrl.u32 %v349, 7
      %v351 = vsub.s32 3, %v350
      %v352 = vrot.slane %v333, %v351
      %v353 = vlaneseq
      %v354 = vshrl.u32 %v353, 7
      %v355 = vsub.s32 4, %v354
      %v356 = vrot.slane %v333, %v355
      %v357 = vlaneseq
      %v358 = vshrl.u32 %v357, 7
      %v359 = vsub.s32 5, %v358
      %v360 = vrot.slane %v333, %v359
      %v361 = vlaneseq
      %v362 = vshrl.u32 %v361, 7
      %v363 = vsub.s32 6, %v362
      %v364 = vrot.slane %v333, %v363
      %v365 = vlaneseq
      %v366 = vshrl.u32 %v365, 7
      %v367 = vsub.s32 7, %v366
      %v368 = vrot.slane %v333, %v367
      %v369 = vlaneseq
      %v370 = vshrl.u32 %v369, 7
      %v371 = vsub.s32 0, %v370
      %v372 = vrot.slane %v334, %v371
      %v373 = vlaneseq
      %v374 = vshrl.u32 %v373, 7
      %v375 = vsub.s32 1, %v374
      %v376 = vrot.slane %v334, %v375
      %v377 = vlaneseq
      %v378 = vshrl.u32 %v377, 7
      %v379 = vsub.s32 2, %v378
      %v380 = vrot.slane %v334, %v379
      %v381 = vlaneseq
      %v382 = vshrl.u32 %v381, 7
      %v383 = vsub.s32 3, %v382
      %v384 = vrot.slane %v334, %v383
      %v385 = vlaneseq
      %v386 = vshrl.u32 %v385, 7
      %v387 = vsub.s32 4, %v386
      %v388 = vrot.slane %v334, %v387
      %v389 = vlaneseq
      %v390 = vshrl.u32 %v389, 7
      %v391 = vsub.s32 5, %v390
      %v392 = vrot.slane %v334, %v391
      %v393 = vlaneseq
      %v394 = vshrl.u32 %v393, 7
      %v395 = vsub.s32 6, %v394
      %v396 = vrot.slane %v334, %v395
      %v397 = vlaneseq
      %v398 = vshrl.u32 %v397, 7
      %v399 = vsub.s32 7, %v398
      %v400 = vrot.slane %v334, %v399
      %vm417 = vcmask 1040384
      %v418 = vsel %vm417, %v340, 0.0
      %v419 = vsel %vm417, %v344, 0.0
      %v420 = vadd.f32 %v418, %v419
      %v421 = vsel %vm417, %v348, 0.0
      %v422 = vadd.f32 %v420, %v421
      %v423 = vsel %vm417, %v352, 0.0
      %v424 = vadd.f32 %v422, %v423
      %v425 = vsel %vm417, %v356, 0.0
      %v426 = vadd.f32 %v424, %v425
      %v427 = vsel %vm417, %v360, 0.0
      %v428 = vadd.f32 %v426, %v427
      %v429 = vsel %vm417, %v364, 0.0
      %v430 = vadd.f32 %v428, %v429
      %v431 = vsel %vm417, %v368, 0.0
      %v432 = vadd.f32 %v430, %v431
      %v433 = vsel %vm417, %v372, 0.0
      %v434 = vadd.f32 %v432, %v433
      %v435 = vsel %vm417, %v376, 0.0
      %v436 = vadd.f32 %v434, %v435
      %v437 = vsel %vm417, %v380, 0.0
      %v438 = vadd.f32 %v436, %v437
      %v439 = vsel %vm417, %v384, 0.0
      %v440 = vadd.f32 %v438, %v439
      %v441 = vsel %vm417, %v388, 0.0
      %v442 = vadd.f32 %v440, %v441
      %v443 = vsel %vm417, %v392, 0.0
      %v444 = vadd.f32 %v442, %v443
      %v445 = vsel %vm417, %v396, 0.0
      %v446 = vadd.f32 %v444, %v445
      %v447 = vsel %vm417, %v400, 0.0
      %v448 = vadd.f32 %v446, %v447
      %449 = vadd.xlane.f32.xlu0 %v448
      %v450 = vpop.xlane.xlu0 %449
      %v451 = vrot.slane %v450, 4
      %v452 = vadd.f32 %v450, %v451
      %v453 = vrot.slane %v452, 2
      %v454 = vadd.f32 %v452, %v453
      %v455 = vrot.slane %v454, 1
      %v456 = vadd.f32 %v454, %v455
      %s457 = vtos %v456
      %v458 = vstv %s457
      %v459 = vmul.f32 %v458, 0.00048828125
      %v460 = vld [vmem:[%s2] sm:$0x3]
      %v461 = vld [vmem:[%s3] sm:$0x3]
      %v462 = vadd.f32 %v461, 1.0
      %v463 = vmul.f32 %v460, %v460
      %v464 = vsub.f32 %v462, %v463
      %v465 = vmul.f32 %v461, 1.442695
      %v466 = vpow.pop %v465
      %v467 = vsub.f32 %v464, %v466
      %vm468 = vcmask 254976
      %v469 = vsel %vm468, %v467, 0.0
      %470 = vadd.xlane.f32.xlu0 %v469
      %v471 = vpop.xlane.xlu0 %470
      %v472 = vrot.slane %v471, 4
      %v473 = vadd.f32 %v471, %v472
      %v474 = vrot.slane %v473, 2
      %v475 = vadd.f32 %v473, %v474
      %v476 = vrot.slane %v475, 1
      %v477 = vadd.f32 %v475, %v476
      %s478 = vtos %v477
      %v479 = vstv %s478
      %v480 = vmul.f32 %v479, -0.5
      %v481 = vld [vmem:[%s5] sm:$0x3]
      %v482 = vld [vmem:[%s4] sm:$0x3]
      %v483 = vld [vmem:[%s6] sm:$0x1]
      %v484 = vld [vmem:[%s7] sm:$0x1]
      %v485 = vmin.f32 %v482, 0.0
      %v486 = vand.u32 2147483647, %v482
      %v487 = vsub.f32 0.0, %v486
      %v488 = vmul.f32 %v487, 1.442695
      %v489 = vpow.pop %v488
      %v490 = vadd.f32 %v489, 1.0
      %v491 = vlog2.pop %v490
      %v492 = vmul.f32 %v491, 0.6931472
      %v493 = vsub.f32 %v485, %v492
      %v494 = vmax.f32 %v493, -100.0
      %v495 = vsub.f32 %v493, %v482
      %v496 = vmax.f32 %v495, -100.0
      %v497 = vmul.f32 %v481, %v494
      %v498 = vsub.f32 1.0, %v481
      %v499 = vmul.f32 %v498, %v496
      %v500 = vadd.f32 %v497, %v499
      %v501 = vsub.f32 0.0, %v500
      %v503 = vlaneseq
      %v504 = vshrl.u32 %v503, 7
      %v505 = vsub.s32 0, %v504
      %v506 = vrot.slane %v483, %v505
      %v508 = vmul.f32 %v501, %v506
      %v510 = vlaneseq
      %v511 = vshrl.u32 %v510, 7
      %v512 = vsub.s32 0, %v511
      %v513 = vrot.slane %v484, %v512
      %v515 = vmul.f32 %v508, %v513
      %vm516 = vcmask 58368
      %v517 = vsel %vm516, %v515, 0.0
      %518 = vadd.xlane.f32.xlu0 %v517
      %v519 = vpop.xlane.xlu0 %518
      %v520 = vrot.slane %v519, 4
      %v521 = vadd.f32 %v519, %v520
      %v522 = vrot.slane %v521, 2
      %v523 = vadd.f32 %v521, %v522
      %v524 = vrot.slane %v523, 1
      %v525 = vadd.f32 %v523, %v524
      %s526 = vtos %v525
      %v527 = vstv %s526
      %vm528 = vcmask 57344
      %v529 = vsel %vm528, %v484, 0.0
      %530 = vadd.xlane.f32.xlu0 %v529
      %v531 = vpop.xlane.xlu0 %530
      %v532 = vrot.slane %v531, 4
      %v533 = vadd.f32 %v531, %v532
      %v534 = vrot.slane %v533, 2
      %v535 = vadd.f32 %v533, %v534
      %v536 = vrot.slane %v535, 1
      %v537 = vadd.f32 %v535, %v536
      %s538 = vtos %v537
      %v539 = vstv %s538
      %v540 = vmul.f32 %v539, 2.0
      %v541 = vmax.f32 %v540, 1.0
      %vm542 = vcmp.gt.f32.partialorder %v539, 0.0
      %v543 = vrcp.pop %v541
      %v544 = vmul.f32 %v527, %v543
      %v545 = vsel %vm542, %v544, 0.0
      %v546 = vlaneseq
      %v547 = vand.u32 %v546, 127
      %vm548 = vcmp.eq.s32.totalorder %v547, 0
      %v549 = vsel %vm548, 1, 0
      %v550 = vcvt.s32.f32 %v549
      %v551 = vmul.f32 %v459, %v550
      %vm552 = vcmp.eq.s32.totalorder %v547, 1
      %v553 = vsel %vm552, 1, 0
      %v554 = vcvt.s32.f32 %v553
      %v555 = vmul.f32 %v480, %v554
      %v556 = vadd.f32 %v551, %v555
      %vm557 = vcmp.eq.s32.totalorder %v547, 2
      %v558 = vsel %vm557, 1, 0
      %v559 = vcvt.s32.f32 %v558
      %v560 = vmul.f32 %v545, %v559
      %v561 = vadd.f32 %v556, %v560
      %vm562 = vcmp.eq.s32.totalorder %v86, 0
      %v563 = vsel %vm562, %v561, 0.0
      %564 = vst [vmem:[#allocation8] sm:$0xff] %v563
    $region49: #{tpu_custom_call.1} parent=1 // pred_fallthru
      _
    // Predicated region
    $region50: #{tpu_custom_call.1} parent=1 // pred_check
      _
    $region51: #{tpu_custom_call.1} parent=1 // pred_check_branch
      %566 = sbr.rel (0) target = $region53
    $region52: #{tpu_custom_call.1} parent=1 // pred_region
      %s568 = ssub.s32 128, 128
      %569 = vsyncadd [#allocation5], %s568
      %s571 = sshll.u32 [#allocation8], 4
      %s572 = int_to_ptr.vmem [resolvable:$true] %s571
      %574 = dma.vmem_to_hbm [thread:$0]  %s572, 128, %s8, [#allocation5]
    $region53: #{tpu_custom_call.1} parent=1 // pred_fallthru
      _
    // Predicated region
    $region54: #{tpu_custom_call.1} parent=1 // pred_check
      _
    $region55: #{tpu_custom_call.1} parent=1 // pred_check_branch
      %576 = sbr.rel (0) target = $region57
    $region56: #{tpu_custom_call.1} parent=1 // pred_region
      %577 = dma.done [#allocation5], 128
    $region57: #{tpu_custom_call.1} parent=1 // pred_fallthru
      _
    %578 = vsyncpa [#allocation4], 1
    %579 = vsyncpa [#allocation7], 1
    %580 = vsyncpa [#allocation5], 1

</llo_original>
